<compile_context>
chip_gen: v6e
topology: v6e:2x2x1
jax: 0.10.0
libtpu: 0.0.40
codegen_flags: <defaults>
</compile_context>

<pallas_src>
import jax
import jax.numpy as jnp
from jax import lax
from jax.experimental import pallas as pl
from jax.experimental.pallas import tpu as pltpu


def _make_kernel(C, C_out, H, W, tb, tn):
    row_scale = 2.0 / (H - 1)
    col_scale = 2.0 / (W - 1)
    w_is_pow2 = (W & (W - 1)) == 0

    def kernel(x_ref, o_ref):
        # --- passthrough channels: single direct streaming store, no temps ---
        o_ref[:, :C, :] = x_ref[...]

        # --- coordinate channels, computed once per tile at (1, tn) ---
        off = pl.program_id(1) * tn
        flat = lax.broadcasted_iota(jnp.int32, (1, tn), 1) + off
        if w_is_pow2:
            shift = W.bit_length() - 1
            row = flat >> shift
            col = flat & (W - 1)
        else:
            # f32 quotient estimate, then exact integer off-by-one correction.
            q = jnp.floor(flat.astype(jnp.float32) / float(W)).astype(jnp.int32)
            r = flat - q * W
            q = jnp.where(r < 0, q - 1, q)
            r = jnp.where(r < 0, r + W, r)
            q = jnp.where(r >= W, q + 1, q)
            r = jnp.where(r >= W, r - W, r)
            row, col = q, r
        row_c = row.astype(jnp.float32) * row_scale - 1.0          # (1, tn)
        col_c = col.astype(jnp.float32) * col_scale - 1.0          # (1, tn)
        pe = jnp.concatenate([row_c, col_c], axis=0).astype(o_ref.dtype)  # (2, tn)

        # Same 2-channel tile for every batch row in the block; write it per
        # row (static unroll, tb is small) instead of materializing a
        # (tb, 2, tn) broadcast in vregs.
        for b in range(tb):
            o_ref[b, C:, :] = pe

    return kernel


def pos_encoding_simple(x, sidelength, in_features=2):
    """Pallas equivalent of PosEncodingSimple(in_features=2, sidelength=(H, W)).forward(x)."""
    assert in_features == 2, "only the 2-D coordinate grid is implemented"
    B, C, H, W = x.shape
    assert (H, W) == tuple(sidelength)
    assert H > 1 and W > 1, "reference divides by (sidelength - 1)"
    assert C > 0
    if W & (W - 1) != 0:
        # Non-power-of-2 W uses an f32 quotient estimate; flat index must be
        # exactly representable in f32 for the +/-1 correction to suffice.
        assert H * W <= 2 ** 24, "H*W too large for exact coordinate recovery"

    N = H * W
    C_out = C + in_features
    x_flat = x.reshape(B, C, N)
    itemsize = jnp.dtype(x.dtype).itemsize

    LANE = 128
    MAX_TN = 4096
    tn = N if N <= MAX_TN else MAX_TN        # full extent, or a multiple of 128

    def _pad8(c):
        return -(-c // 8) * 8

    # One (input + output) block pair per packed batch row, double-buffered
    # (x2), with the channel axis padded to a multiple of 8 sublanes.
    per_batch_bytes = 2 * (_pad8(C) + _pad8(C_out)) * tn * itemsize
    VMEM_BUDGET = 16 * 1024 * 1024           # fits default scoped VMEM everywhere
    tb = int(max(1, min(B, VMEM_BUDGET // max(per_batch_bytes, 1), 64)))

    # Keep at least 2 grid blocks where possible so both v7x TensorCores work.
    if pl.cdiv(B, tb) * pl.cdiv(N, tn) < 2:
        if B >= 2:
            tb = pl.cdiv(B, 2)
        elif N >= 2 * LANE:
            tn = pl.cdiv(pl.cdiv(N, 2), LANE) * LANE

    grid = (pl.cdiv(B, tb), pl.cdiv(N, tn))

    out_flat = pl.pallas_call(
        _make_kernel(C, C_out, H, W, tb, tn),
        out_shape=jax.ShapeDtypeStruct((B, C_out, N), x.dtype),
        grid=grid,
        in_specs=[pl.BlockSpec((tb, C, tn), lambda b, n: (b, 0, n))],
        out_specs=pl.BlockSpec((tb, C_out, tn), lambda b, n: (b, 0, n)),
        compiler_params=pltpu.CompilerParams(
            dimension_semantics=("parallel", "parallel"),
            vmem_limit_bytes=32 * 1024 * 1024),
    )(x_flat)
    return out_flat.reshape(B, C_out, H, W)


if __name__ == "__main__":
    key = jax.random.PRNGKey(0)
    B, C, H, W = 2, 4, 16, 16
    x = jax.random.normal(key, (B, C, H, W), dtype=jnp.float32)

    out = jax.block_until_ready(pos_encoding_simple(x, (H, W)))

    # Pure-JAX reference of the PyTorch forward.
    ii = (jnp.arange(H, dtype=jnp.float32) / (H - 1) - 0.5) * 2.0
    jj = (jnp.arange(W, dtype=jnp.float32) / (W - 1) - 0.5) * 2.0
    pe = jnp.stack(
        [jnp.broadcast_to(ii[:, None], (H, W)),
         jnp.broadcast_to(jj[None, :], (H, W))], axis=0)  # (2, H, W)
    ref = jnp.concatenate([x, jnp.broadcast_to(pe[None], (B, 2, H, W))], axis=1)

    assert out.shape == (B, C + 2, H, W), out.shape
    assert out.dtype == x.dtype
    assert jnp.allclose(out, ref, atol=1e-5), float(jnp.max(jnp.abs(out - ref)))
    print("KERNEL_OK")
</pallas_src>

<mosaic_0001>
module attributes {stable_mosaic.version = 11 : i64} {
  func.func @kernel(%arg0: i32, %arg1: i32, %arg2: memref<1x4x256xf32, #tpu.memory_space<vmem>>, %arg3: memref<1x6x256xf32, #tpu.memory_space<vmem>>) attributes {dimension_semantics = [#tpu.dimension_semantics<parallel>, #tpu.dimension_semantics<parallel>], iteration_bounds = array<i64: 2, 1>, scalar_prefetch = 0 : i64, scratch_operands = 0 : i64, tpu.core_type = #tpu.core_type<tc>, window_params = [{transform_indices = @transform_0, window_bounds = array<i64: 1, 4, 256>}, {transform_indices = @transform_1, window_bounds = array<i64: 1, 6, 256>}]} {
    %c0 = arith.constant 0 : index
    %c0_0 = arith.constant 0 : index
    %c0_1 = arith.constant 0 : index
    %0 = vector.load %arg2[%c0, %c0_0, %c0_1] : memref<1x4x256xf32, #tpu.memory_space<vmem>>, vector<1x4x256xf32>
    %c0_2 = arith.constant 0 : index
    %c0_3 = arith.constant 0 : index
    %c0_4 = arith.constant 0 : index
    %1 = vector.load %arg3[%c0_2, %c0_3, %c0_4] : memref<1x6x256xf32, #tpu.memory_space<vmem>>, vector<1x4x256xf32>
    tpu.vector_store %arg3[%c0_2, %c0_3, %c0_4], %0 {strides = array<i32>} : memref<1x6x256xf32, #tpu.memory_space<vmem>>, vector<1x4x256xf32>,
    %c256_i32 = arith.constant 256 : i32
    %2 = arith.muli %arg1, %c256_i32 : i32
    %3 = tpu.iota {dimensions = array<i32: 1>} : vector<1x256xi32>
    %4 = vector.broadcast %2 : i32 to vector<1x256xi32>
    %5 = arith.addi %3, %4 : vector<1x256xi32>
    %c4_i32 = arith.constant 4 : i32
    %6 = vector.broadcast %c4_i32 : i32 to vector<1x256xi32>
    %7 = arith.shrsi %5, %6 : vector<1x256xi32>
    %c15_i32 = arith.constant 15 : i32
    %8 = vector.broadcast %c15_i32 : i32 to vector<1x256xi32>
    %9 = arith.andi %5, %8 : vector<1x256xi32>
    %10 = arith.sitofp %7 : vector<1x256xi32> to vector<1x256xf32>
    %cst = arith.constant 0.13333334 : f32
    %11 = vector.broadcast %cst : f32 to vector<1x256xf32>
    %12 = arith.mulf %10, %11 : vector<1x256xf32>
    %cst_5 = arith.constant 1.000000e+00 : f32
    %13 = vector.broadcast %cst_5 : f32 to vector<1x256xf32>
    %14 = arith.subf %12, %13 : vector<1x256xf32>
    %15 = arith.sitofp %9 : vector<1x256xi32> to vector<1x256xf32>
    %cst_6 = arith.constant 0.13333334 : f32
    %16 = vector.broadcast %cst_6 : f32 to vector<1x256xf32>
    %17 = arith.mulf %15, %16 : vector<1x256xf32>
    %cst_7 = arith.constant 1.000000e+00 : f32
    %18 = vector.broadcast %cst_7 : f32 to vector<1x256xf32>
    %19 = arith.subf %17, %18 : vector<1x256xf32>
    %20 = tpu.concatenate %14, %19 in 0 : vector<1x256xf32>, vector<1x256xf32> -> vector<2x256xf32>
    %c0_8 = arith.constant 0 : index
    %c4 = arith.constant 4 : index
    %c0_9 = arith.constant 0 : index
    %21 = vector.load %arg3[%c0_8, %c4, %c0_9] : memref<1x6x256xf32, #tpu.memory_space<vmem>>, vector<1x2x256xf32>
    %22 = vector.shape_cast %21 : vector<1x2x256xf32> to vector<2x256xf32>
    %23 = vector.shape_cast %20 : vector<2x256xf32> to vector<1x2x256xf32>
    tpu.vector_store %arg3[%c0_8, %c4, %c0_9], %23 {strides = array<i32>} : memref<1x6x256xf32, #tpu.memory_space<vmem>>, vector<1x2x256xf32>,
    return
  }
  func.func @transform_0(%arg0: i32, %arg1: i32) -> (i32, i32, i32) {
    %c0_i32 = arith.constant 0 : i32
    %c0_i32_0 = arith.constant 0 : i32
    return %arg0, %c0_i32, %arg1 : i32, i32, i32
  }
  func.func @transform_1(%arg0: i32, %arg1: i32) -> (i32, i32, i32) {
    %c0_i32 = arith.constant 0 : i32
    %c0_i32_0 = arith.constant 0 : i32
    return %arg0, %c0_i32, %arg1 : i32, i32, i32
  }
}

</mosaic_0001>

<llo_original>
// kernel: tpu_custom_call.1
$region0: #{tpu_custom_call.1}
  #allocation0 [shape = 'u32[]', space=smem, size = 0x4, offset = 0x4, fixed_abs, tag = 'smem constant byte address 0x4 - core index']
  #allocation1 [shape = 'u32[144,128]{1,0:T(1,128)}', space=vmem, size = 0x12000, scoped, tag = 'internal scratch']
  %s0 = inlined_call_operand.hbm [shape: f32[2,4,256], index: 0, kind: input, shape index: {}]
  %s1 = inlined_call_operand.vmem [shape: f32[2,6,256], index: 1, kind: output, shape index: {}]
  %s2 = sld [smem:[#allocation0]]
  $region41: #{tpu_custom_call.1} parent=0
    _
  %s4 = ssub.s32 1, %s2
  %s5 = scalar_select 0, %s4, %s2
  $region1: #{tpu_custom_call.1} parent=0
    #allocation2 [shape = 'u8[8192]{0}', space=vmem, size = 0x2000, scoped, tag = 'input window, operand 0']
    #allocation3 [shape = 's32[2]{0}', space=sflag, size = 0x8, scoped, tag = 'scoped memory for tpu_custom_call.1']
    %6 = vsyncpa [#allocation3], 0
    %s7 = scalar_lea.sflag [#allocation3], 1
    %8 = vsyncpa %s7, 0
    loop: start=0, step=1, limit=4
    $region2: #{tpu_custom_call.1} parent=1 // loop_pre_header
      _
    $region3: #{tpu_custom_call.1} parent=1 // loop_header
      %s10 = sphi 0, %s14
      %p11 = scmp.ge.s32.totalorder %s10, 4
      %s17 = sphi 0, %s29
      %s18 = sphi 0, %s25
      %s19 = sphi 0, %s17
      %s20 = sphi 0, %s18
      %s21 = sphi 0, %s19
      %s22 = sphi 0, %s20
      %s34 = sphi 0, %s36
      %s37 = sphi 0, %s34
      %s38 = sphi 0, %s37
      %s54 = sphi 0, %s38
      %s62 = sphi 0, %s64
      %s65 = sphi 0, %s62
      %s66 = sphi 0, %s65
      %s82 = sphi 0, %s66
    $region4: #{tpu_custom_call.1} parent=1 // loop_header_branch
      %13 = sbr.rel (%p11) target = $region8
    $region5: #{tpu_custom_call.1} parent=1 // loop_body
      %s15 = ssub.s32 %s10, 1
      %s16 = ssub.s32 %s10, 2
      %s23 = sadd.s32 1, %s18
      %p24 = scmp.ge.s32.totalorder %s23, 1
      %s25 = scalar_select %p24, 0, %s23
      %s26 = sadd.s32 1, %s17
      %s27 = scalar_select %p24, %s26, %s17
      %p28 = scmp.ge.s32.totalorder %s27, 2
      %s29 = scalar_select %p28, 0, %s27
      %s30 = ssub.s32 %s17, %s29
      %s31 = ssub.s32 %s18, %s25
      %s32 = sor.u32 %s30, %s31
      %p33 = scmp.eq.s32.totalorder %s32, 0
      %s35 = sadd.s32 %s34, 1
      %s36 = scalar_select %p33, %s34, %s35
      %p39 = pneg %p33
      %p40 = scmp.eq.s32.totalorder %s10, 1
      %p41 = por %p39, %p40
      %p42 = scmp.ne.s32.totalorder %s34, %s37
      %p43 = scmp.eq.s32.totalorder %s10, 0
      %p44 = por %p42, %p43
      %p45 = scmp.ne.s32.totalorder %s34, %s37
      %p46 = scmp.eq.s32.totalorder %s15, 1
      %p47 = por %p45, %p46
      %p48 = scmp.ne.s32.totalorder %s37, %s38
      %p49 = scmp.eq.s32.totalorder %s15, 0
      %p50 = por %p48, %p49
      %p51 = scmp.ne.s32.totalorder %s37, %s38
      %p52 = scmp.eq.s32.totalorder %s16, 1
      %p53 = por %p51, %p52
      %p55 = scmp.ne.s32.totalorder %s38, %s54
      %p56 = scmp.eq.s32.totalorder %s16, 0
      %p57 = por %p55, %p56
      %s58 = ssub.s32 %s17, %s29
      %s59 = ssub.s32 %s18, %s25
      %s60 = sor.u32 %s58, %s59
      %p61 = scmp.eq.s32.totalorder %s60, 0
      %s63 = sadd.s32 %s62, 1
      %s64 = scalar_select %p61, %s62, %s63
      %p67 = pneg %p61
      %p68 = scmp.eq.s32.totalorder %s10, 1
      %p69 = por %p67, %p68
      %p70 = scmp.ne.s32.totalorder %s62, %s65
      %p71 = scmp.eq.s32.totalorder %s10, 0
      %p72 = por %p70, %p71
      %p73 = scmp.ne.s32.totalorder %s62, %s65
      %p74 = scmp.eq.s32.totalorder %s15, 1
      %p75 = por %p73, %p74
      %p76 = scmp.ne.s32.totalorder %s65, %s66
      %p77 = scmp.eq.s32.totalorder %s15, 0
      %p78 = por %p76, %p77
      %p79 = scmp.ne.s32.totalorder %s65, %s66
      %p80 = scmp.eq.s32.totalorder %s16, 1
      %p81 = por %p79, %p80
      %p83 = scmp.ne.s32.totalorder %s66, %s82
      %p84 = scmp.eq.s32.totalorder %s16, 0
      %p85 = por %p83, %p84
      %p86 = scmp.le.s32.totalorder 1, %s10
      %p87 = scmp.lt.s32.totalorder %s10, 3
      %p88 = pnand %p86, %p87
      %p89 = pneg %p88
      // Predicated region
      $region9: #{tpu_custom_call.1} parent=5 // pred_check
        _
      $region10: #{tpu_custom_call.1} parent=5 // pred_check_branch
        %91 = sbr.rel (%p88) target = $region12
      $region11: #{tpu_custom_call.1} parent=5 // pred_region
        %s92 = ssub.s32 %s10, 1
      $region12: #{tpu_custom_call.1} parent=5 // pred_fallthru
        _
      %p93 = scmp.lt.s32.totalorder %s10, 2
      // Predicated region
      $region13: #{tpu_custom_call.1} parent=5 // pred_check
        %p94 = pneg %p93
      $region14: #{tpu_custom_call.1} parent=5 // pred_check_branch
        %96 = sbr.rel (%p94) target = $region16
      $region15: #{tpu_custom_call.1} parent=5 // pred_region
        // Predicated region
        $region17: #{tpu_custom_call.1} parent=15 // pred_check
          %p97 = pneg %p44
        $region18: #{tpu_custom_call.1} parent=15 // pred_check_branch
          %99 = sbr.rel (%p97) target = $region20
        $region19: #{tpu_custom_call.1} parent=15 // pred_region
          %s100 = sand.u32 %s34, 1
          %s101 = scalar_lea.sflag [#allocation3], %s100
          %s102 = sand.u32 %s34, 1
          %s103 = smul.addr %s102, 8
          %s104 = scalar_lea.vmem [#allocation2], %s103
          %s105 = smul.u32 2, %s18
          %s107 = ssub.s32 128, 128
          %108 = vsyncadd %s101, %s107
          %s109 = smul.addr %s17, 2
          %s110 = sadd.s32 %s105, %s109
          %s111 = smul.addr %s110, 64
          %s112 = scalar_lea.hbm %s0, %s111
          %s114 = sshll.u32 %s104, 4
          %s115 = int_to_ptr.vmem [resolvable:$true] %s114
          %117 = dma.hbm_to_vmem [thread:$0]  %s112, 128, %s115, %s101
        $region20: #{tpu_custom_call.1} parent=15 // pred_fallthru
          _
      $region16: #{tpu_custom_call.1} parent=5 // pred_fallthru
        _
      %p118 = scmp.le.s32.totalorder 1, %s10
      %p119 = scmp.lt.s32.totalorder %s10, 3
      %p120 = pnand %p118, %p119
      %p121 = pneg %p120
      // Predicated region
      $region21: #{tpu_custom_call.1} parent=5 // pred_check
        _
      $region22: #{tpu_custom_call.1} parent=5 // pred_check_branch
        %123 = sbr.rel (%p120) target = $region24
      $region23: #{tpu_custom_call.1} parent=5 // pred_region
        %s124 = ssub.s32 %s10, 1
        %s125 = sand.u32 %s37, 1
        %s126 = scalar_lea.sflag [#allocation3], %s125
        %s127 = sand.u32 %s37, 1
        %s128 = smul.addr %s127, 8
        %s129 = scalar_lea.vmem [#allocation2], %s128
        // Predicated region
        $region25: #{tpu_custom_call.1} parent=23 // pred_check
          %p130 = pneg %p50
        $region26: #{tpu_custom_call.1} parent=23 // pred_check_branch
          %132 = sbr.rel (%p130) target = $region28
        $region27: #{tpu_custom_call.1} parent=23 // pred_region
          %133 = dma.done %s126, 128
        $region28: #{tpu_custom_call.1} parent=23 // pred_fallthru
          _
        %s134 = sand.u32 %s37, 1
        %s135 = scalar_lea.sflag [#allocation3], %s134
        %s136 = sand.u32 %s37, 1
        %s137 = smul.addr %s136, 8
        %s138 = scalar_lea.vmem [#allocation2], %s137
        %p139 = pneg %p50
        %p140 = pneg %p47
        %p141 = pneg %p78
        %p142 = pneg %p75
        %s143 = smul.u32 2, %s20
        %p144 = scmp.lt.s32.totalorder %s19, 1
        %s145 = scalar_select %p144, %s19, 1
        %p146 = scmp.lt.s32.totalorder %s143, 1
        %s147 = scalar_select %p146, %s143, 1
        %s148 = smul.addr %s145, 2
        %s149 = sadd.s32 %s147, %s148
        %s150 = smul.addr %s149, 8
        %s151 = scalar_lea.vmem %s1, %s150
        %s152 = smul.u32 2, %s20
        %s153 = smul.u32 2, %s20
        %p154 = scmp.lt.s32.totalorder %s19, 1
        %s155 = scalar_select %p154, %s19, 1
        %p156 = scmp.lt.s32.totalorder %s153, 1
        %s157 = scalar_select %p156, %s153, 1
        %s158 = smul.addr %s155, 2
        %s159 = sadd.s32 %s157, %s158
        %s160 = smul.addr %s159, 8
        %s161 = scalar_lea.vmem %s1, %s160
        %s162 = smul.u32 2, %s20
        %v163 = vld [vmem:[%s129] sm:$0xff]
        %v165 = vcombine.high %v163, %v163
        %167 = vst [vmem:[%s161] sm:$0xf] %v163
        %168 = vst [vmem:[%s161 + $0x8] sm:$0xf] %v165
        %s169 = smul.u32 %s20, 256
        %v170 = vlaneseq
        %v171 = vand.u32 %v170, 127
        %v172 = vadd.s32 %v171, 128
        %v173 = vstv %s169
        %v174 = vadd.s32 %v171, %v173
        %v175 = vadd.s32 %v172, %v173
        %v176 = vshra.s32 %v174, 4
        %v177 = vshra.s32 %v175, 4
        %v178 = vand.u32 %v174, 15
        %v179 = vand.u32 %v175, 15
        %v180 = vcvt.s32.f32 %v176
        %v181 = vcvt.s32.f32 %v177
        %v182 = vmul.f32 %v180, 0.13333334
        %v183 = vmul.f32 %v181, 0.13333334
        %v184 = vsub.f32 %v182, 1.0
        %v185 = vsub.f32 %v183, 1.0
        %v186 = vcvt.s32.f32 %v178
        %v187 = vcvt.s32.f32 %v179
        %v188 = vmul.f32 %v186, 0.13333334
        %v189 = vmul.f32 %v187, 0.13333334
        %v190 = vsub.f32 %v188, 1.0
        %v191 = vsub.f32 %v189, 1.0
        %vm192 = vcmask 1040384
        %v193 = vsel %vm192, %v184, %v190
        %v194 = vsel %vm192, %v185, %v191
        %v197 = vrot.slane %v193, 4
        %v198 = vrot.slane %v194, 4
        %201 = vst [vmem:[%s161] sm:$0x30] %v197
        %202 = vst [vmem:[%s161 + $0x8] sm:$0x30] %v198
        %s203 = smul.u32 2, %s20
        %p204 = scmp.lt.s32.totalorder %s19, 1
        %s205 = scalar_select %p204, %s19, 1
        %p206 = scmp.lt.s32.totalorder %s203, 1
        %s207 = scalar_select %p206, %s203, 1
        %s208 = smul.addr %s205, 2
        %s209 = sadd.s32 %s207, %s208
        %s210 = smul.addr %s209, 8
        %s211 = scalar_lea.vmem %s1, %s210
        // Predicated region
        $region29: #{tpu_custom_call.1} parent=23 // pred_check
          %p212 = pneg %p75
        $region30: #{tpu_custom_call.1} parent=23 // pred_check_branch
          %214 = sbr.rel (%p212) target = $region32
        $region31: #{tpu_custom_call.1} parent=23 // pred_region
          %s215 = smul.u32 2, %s20
        $region32: #{tpu_custom_call.1} parent=23 // pred_fallthru
          _
      $region24: #{tpu_custom_call.1} parent=5 // pred_fallthru
        _
      %p216 = scmp.le.s32.totalorder 2, %s10
      // Predicated region
      $region33: #{tpu_custom_call.1} parent=5 // pred_check
        %p217 = pneg %p216
      $region34: #{tpu_custom_call.1} parent=5 // pred_check_branch
        %219 = sbr.rel (%p217) target = $region36
      $region35: #{tpu_custom_call.1} parent=5 // pred_region
        %s220 = ssub.s32 %s10, 2
        // Predicated region
        $region37: #{tpu_custom_call.1} parent=35 // pred_check
          %p221 = pneg %p81
        $region38: #{tpu_custom_call.1} parent=35 // pred_check_branch
          %223 = sbr.rel (%p221) target = $region40
        $region39: #{tpu_custom_call.1} parent=35 // pred_region
          %s224 = smul.u32 2, %s22
          %p225 = scmp.lt.s32.totalorder %s21, 1
          %s226 = scalar_select %p225, %s21, 1
          %p227 = scmp.lt.s32.totalorder %s224, 1
          %s228 = scalar_select %p227, %s224, 1
          %s229 = smul.addr %s226, 2
          %s230 = sadd.s32 %s228, %s229
          %s231 = smul.addr %s230, 8
          %s232 = scalar_lea.vmem %s1, %s231
        $region40: #{tpu_custom_call.1} parent=35 // pred_fallthru
          _
      $region36: #{tpu_custom_call.1} parent=5 // pred_fallthru
        _
    $region6: #{tpu_custom_call.1} parent=1 // loop_footer
      %s14 = sadd.s32 1, %s10
    $region7: #{tpu_custom_call.1} parent=1 // loop_footer_branch
      %9 = sbr.rel target = $region3
    $region8: #{tpu_custom_call.1} parent=1 // loop_exit
      _
    %233 = vsyncpa [#allocation3], 1
    %s234 = scalar_lea.sflag [#allocation3], 1
    %235 = vsyncpa %s234, 1

</llo_original>
